<compile_context>
chip_gen: v7x
topology: tpu7x:2x2x1
jax: 0.10.0
libtpu: 0.0.40
codegen_flags: <defaults>
</compile_context>

<pallas_src>
import functools
import math

import jax
import jax.numpy as jnp
from jax.experimental import pallas as pl
from jax.experimental.pallas import tpu as pltpu

_LANE = 128


# ----------------------------------------------------------------------------
# Small helpers
# ----------------------------------------------------------------------------
def _round_up(x, m):
    return ((x + m - 1) // m) * m


def _cdiv(a, b):
    return (a + b - 1) // b


def _chip_traits():
    """Generation-dependent tiling knobs (defensive: falls back to 1-TC)."""
    try:
        kind = jax.devices()[0].device_kind.lower()
    except Exception:
        kind = ""
    is_v7 = "v7" in kind
    multi_core = is_v7 or ("v4" in kind) or ("v5p" in kind)
    return {
        "multi_core": multi_core,          # shard the N grid axis across TCs?
        "w_buffers": 3 if is_v7 else 2,    # deeper W pipelining on v7x
        "tn_cap": 512 if multi_core else 1024,
        "tk_cap": 2048,
        "w_block_bytes": 8 << 20,          # per-block budget for the W stream
    }


def _select_kn_tiles(K, N, w_block_itemsize, traits):
    """Choose (tk, tn, Kp, Np) once per cached matrix.

    tn is lane-dense; tk is deep; both divide the padded Kp/Np exactly so the
    matrix can be pre-padded once in __init__.  Padding overshoot is at most
    one 128-wide tile per axis.
    """
    Kp0 = _round_up(max(K, 1), _LANE)
    Np0 = _round_up(max(N, 1), _LANE)

    # N tiles: full width on 1-TC chips; >=2 tiles on multi-TC parts so the
    # "parallel" j axis can shard across TensorCores.
    nt = _cdiv(Np0, traits["tn_cap"])
    if traits["multi_core"] and Np0 >= 2 * _LANE:
        nt = max(nt, 2)
    tn = _round_up(_cdiv(Np0, nt), _LANE)
    Np = tn * nt

    # K tiles: as deep as the per-block W byte budget allows.
    tk_cap = max(
        _LANE,
        min(traits["tk_cap"],
            (traits["w_block_bytes"] // max(tn * w_block_itemsize, 1))
            // _LANE * _LANE),
    )
    kt = _cdiv(Kp0, tk_cap)
    tk = _round_up(_cdiv(Kp0, kt), _LANE)
    Kp = tk * kt
    return tk, tn, Kp, Np


def _pick_tm(M, itemsize):
    sublane = 8 if itemsize >= 4 else (16 if itemsize == 2 else 32)
    return min(_round_up(max(M, 1), sublane), 256)


def _pad2d(w, Kp, Np):
    K, N = w.shape
    if (K, N) != (Kp, Np):
        w = jnp.pad(w, ((0, Kp - K), (0, Np - N)))
    return w


# ----------------------------------------------------------------------------
# Pallas kernels: Y[M, N] = X[M, K] @ W[K, N], f32 accumulation.
# ----------------------------------------------------------------------------
def _mm_kernel_single_k(x_ref, w_ref, o_ref):
    # kt == 1 fast path: no init/accumulate phases needed.
    o_ref[...] = jnp.dot(x_ref[...], w_ref[...], preferred_element_type=jnp.float32)


def _mm_kernel_multi_k(x_ref, w_ref, o_ref):
    # f32 output block stays resident across the k ("arbitrary") axis.
    @pl.when(pl.program_id(2) == 0)
    def _():
        o_ref[...] = jnp.zeros_like(o_ref)

    o_ref[...] += jnp.dot(x_ref[...], w_ref[...], preferred_element_type=jnp.float32)


def _cmm_kernel_single_k(xr_ref, xi_ref, wr_ref, wi_ref, or_ref, oi_ref):
    xr, xi = xr_ref[...], xi_ref[...]
    wr, wi = wr_ref[...], wi_ref[...]
    or_ref[...] = (jnp.dot(xr, wr, preferred_element_type=jnp.float32)
                   - jnp.dot(xi, wi, preferred_element_type=jnp.float32))
    oi_ref[...] = (jnp.dot(xr, wi, preferred_element_type=jnp.float32)
                   + jnp.dot(xi, wr, preferred_element_type=jnp.float32))


def _cmm_kernel_multi_k(xr_ref, xi_ref, wr_ref, wi_ref, or_ref, oi_ref):
    @pl.when(pl.program_id(2) == 0)
    def _():
        or_ref[...] = jnp.zeros_like(or_ref)
        oi_ref[...] = jnp.zeros_like(oi_ref)

    xr, xi = xr_ref[...], xi_ref[...]
    wr, wi = wr_ref[...], wi_ref[...]
    or_ref[...] += (jnp.dot(xr, wr, preferred_element_type=jnp.float32)
                    - jnp.dot(xi, wi, preferred_element_type=jnp.float32))
    oi_ref[...] += (jnp.dot(xr, wi, preferred_element_type=jnp.float32)
                    + jnp.dot(xi, wr, preferred_element_type=jnp.float32))


def _w_blockspec(tk, tn, w_buffers, n_w_blocks):
    # Deeper buffering only when requested (v7x) and there are enough W blocks.
    if w_buffers > 2 and n_w_blocks >= w_buffers:
        return pl.BlockSpec((tk, tn), lambda i, j, k: (k, j),
                            pipeline_mode=pl.Buffered(w_buffers))
    return pl.BlockSpec((tk, tn), lambda i, j, k: (k, j))


def _pallas_matmul_padded(x, w, *, tm, tk, tn, w_buffers):
    """Real matmul on pre-padded operands.  Output is f32 (Mp, Np)."""
    Mp, Kp = x.shape
    Kp2, Np = w.shape
    assert Kp == Kp2 and Mp % tm == 0 and Kp % tk == 0 and Np % tn == 0
    mt, nt, kt = Mp // tm, Np // tn, Kp // tk
    kernel = _mm_kernel_single_k if kt == 1 else _mm_kernel_multi_k

    x_isz = jnp.dtype(x.dtype).itemsize
    w_isz = jnp.dtype(w.dtype).itemsize
    nbuf = max(2, w_buffers if (w_buffers > 2 and nt * kt >= w_buffers) else 2)
    vmem_bytes = (2 * tm * tk * x_isz + nbuf * tk * tn * w_isz + 2 * tm * tn * 4)
    vmem_limit = min(max(int(1.25 * vmem_bytes), 32 << 20), 64 << 20)

    return pl.pallas_call(
        kernel,
        out_shape=jax.ShapeDtypeStruct((Mp, Np), jnp.float32),
        grid_spec=pltpu.PrefetchScalarGridSpec(
            num_scalar_prefetch=0,
            grid=(mt, nt, kt),
            in_specs=[
                pl.BlockSpec((tm, tk), lambda i, j, k: (i, k)),
                _w_blockspec(tk, tn, w_buffers, nt * kt),
            ],
            out_specs=pl.BlockSpec((tm, tn), lambda i, j, k: (i, j)),
        ),
        compiler_params=pltpu.CompilerParams(
            dimension_semantics=("parallel", "parallel", "arbitrary"),
            vmem_limit_bytes=vmem_limit,
        ),
        cost_estimate=pl.CostEstimate(
            flops=2 * Mp * Np * Kp,
            transcendentals=0,
            bytes_accessed=(Mp * Kp) * x_isz + (Kp * Np) * w_isz + Mp * Np * 4,
        ),
    )(x, w)


def _pallas_cmatmul_padded(xr, xi, wr, wi, *, tm, tk, tn):
    """Fused complex matmul: wr/wi streamed once; two f32 outputs (re, im)."""
    Mp, Kp = xr.shape
    Kp2, Np = wr.shape
    assert Kp == Kp2 and Mp % tm == 0 and Kp % tk == 0 and Np % tn == 0
    mt, nt, kt = Mp // tm, Np // tn, Kp // tk
    kernel = _cmm_kernel_single_k if kt == 1 else _cmm_kernel_multi_k

    vmem_bytes = (4 * tm * tk * 4 + 4 * tk * tn * 4 + 4 * tm * tn * 4)
    vmem_limit = min(max(int(1.25 * vmem_bytes), 32 << 20), 64 << 20)

    return pl.pallas_call(
        kernel,
        out_shape=(jax.ShapeDtypeStruct((Mp, Np), jnp.float32),
                   jax.ShapeDtypeStruct((Mp, Np), jnp.float32)),
        grid_spec=pltpu.PrefetchScalarGridSpec(
            num_scalar_prefetch=0,
            grid=(mt, nt, kt),
            in_specs=[
                pl.BlockSpec((tm, tk), lambda i, j, k: (i, k)),
                pl.BlockSpec((tm, tk), lambda i, j, k: (i, k)),
                pl.BlockSpec((tk, tn), lambda i, j, k: (k, j)),
                pl.BlockSpec((tk, tn), lambda i, j, k: (k, j)),
            ],
            out_specs=(pl.BlockSpec((tm, tn), lambda i, j, k: (i, j)),
                       pl.BlockSpec((tm, tn), lambda i, j, k: (i, j))),
        ),
        compiler_params=pltpu.CompilerParams(
            dimension_semantics=("parallel", "parallel", "arbitrary"),
            vmem_limit_bytes=vmem_limit,
        ),
        cost_estimate=pl.CostEstimate(
            flops=8 * Mp * Np * Kp,
            transcendentals=0,
            bytes_accessed=2 * (Mp * Kp + Kp * Np + Mp * Np) * 4,
        ),
    )(xr, xi, wr, wi)


# ----------------------------------------------------------------------------
# Jitted per-call wrappers (only x is padded per call; W is pre-padded).
# ----------------------------------------------------------------------------
@functools.partial(jax.jit, static_argnames=("tk", "tn", "n_cols", "w_buffers"))
def _matmul_real(x_flat, w_pad, *, tk, tn, n_cols, w_buffers):
    M, K = x_flat.shape
    Kp, Np = w_pad.shape
    x = x_flat.astype(w_pad.dtype)
    tm = _pick_tm(M, jnp.dtype(w_pad.dtype).itemsize)
    Mp = _round_up(M, tm)
    if (Mp, Kp) != (M, K):
        x = jnp.pad(x, ((0, Mp - M), (0, Kp - K)))
    y = _pallas_matmul_padded(x, w_pad, tm=tm, tk=tk, tn=tn, w_buffers=w_buffers)
    return y[:M, :n_cols]


@functools.partial(jax.jit, static_argnames=("tk", "tn", "n_cols"))
def _matmul_complex(xr, xi, wr_pad, wi_pad, *, tk, tn, n_cols):
    M, K = xr.shape
    Kp, Np = wr_pad.shape
    xr = xr.astype(jnp.float32)
    xi = xi.astype(jnp.float32)
    tm = _pick_tm(M, 4)
    Mp = _round_up(M, tm)
    if (Mp, Kp) != (M, K):
        pad = ((0, Mp - M), (0, Kp - K))
        xr = jnp.pad(xr, pad)
        xi = jnp.pad(xi, pad)
    yr, yi = _pallas_cmatmul_padded(xr, xi, wr_pad, wi_pad, tm=tm, tk=tk, tn=tn)
    return jax.lax.complex(yr[:M, :n_cols], yi[:M, :n_cols])


# ----------------------------------------------------------------------------
# Concrete dense LinearSystem (JAX / Pallas).
# ----------------------------------------------------------------------------
class DenseLinearSystem:
    """Concrete realization of gmi.linalg.core.LinearSystem.

    A: (N_out, N_in) dense matrix acting on flattened spatial dims.
      forward(x)             : y = A x     x: [B, C, *input_shape]  -> [B, C, *output_shape]
      transpose(y)           : z = A^T y   (torch autograd's VJP for a linear map)
      conjugate(x)           : conj(A conj(x))
      conjugate_transpose(y) : A^H y
    """

    def __init__(self, A, input_shape, output_shape, compute_dtype=None):
        A = jnp.asarray(A)
        input_shape = tuple(int(s) for s in input_shape)
        output_shape = tuple(int(s) for s in output_shape)
        n_in = math.prod(input_shape)
        n_out = math.prod(output_shape)
        assert A.shape == (n_out, n_in), (
            f"A must have shape {(n_out, n_in)}, got {A.shape}")

        self.input_shape = input_shape
        self.output_shape = output_shape
        self._is_complex = bool(jnp.iscomplexobj(A))
        traits = _chip_traits()
        self._traits = traits
        self._w_buffers = traits["w_buffers"]

        if self._is_complex:
            # MXU has no complex (or f64) path: store f32 real/imag parts,
            # pre-padded once; the fused kernel streams each exactly once.
            A = A.astype(jnp.complex64)
            self.A = A
            At = jnp.transpose(A)
            tk_f, tn_f, Kp_f, Np_f = _select_kn_tiles(n_in, n_out, 8, traits)
            self._fwd = dict(
                tk=tk_f, tn=tn_f, n=n_out,
                wr=_pad2d(jnp.real(At).astype(jnp.float32), Kp_f, Np_f),
                wi=_pad2d(jnp.imag(At).astype(jnp.float32), Kp_f, Np_f))
            tk_t, tn_t, Kp_t, Np_t = _select_kn_tiles(n_out, n_in, 8, traits)
            self._tr = dict(
                tk=tk_t, tn=tn_t, n=n_in,
                wr=_pad2d(jnp.real(A).astype(jnp.float32), Kp_t, Np_t),
                wi=_pad2d(jnp.imag(A).astype(jnp.float32), Kp_t, Np_t))
            self.compute_dtype = None
        else:
            if A.dtype == jnp.float64:
                A = A.astype(jnp.float32)   # MXU has no f64 path
            self.A = A
            # Opt-in bf16 weight storage halves A's HBM bytes (the kernel is
            # A-bandwidth bound); f32 accumulation stays inside the kernel.
            # TODO(synk): fp8-e4m3 weights on v7x / int8+per-column scales on
            # v5e/v6e would cut the A stream a further 2-4x if tolerable.
            store = (jnp.dtype(compute_dtype) if compute_dtype is not None
                     else jnp.dtype(A.dtype))
            self.compute_dtype = store
            itemsize = store.itemsize
            tk_f, tn_f, Kp_f, Np_f = _select_kn_tiles(n_in, n_out, itemsize, traits)
            self._fwd = dict(
                tk=tk_f, tn=tn_f, n=n_out,
                w=_pad2d(jnp.asarray(jnp.transpose(A), dtype=store), Kp_f, Np_f))
            tk_t, tn_t, Kp_t, Np_t = _select_kn_tiles(n_out, n_in, itemsize, traits)
            self._tr = dict(
                tk=tk_t, tn=tn_t, n=n_in,
                w=_pad2d(jnp.asarray(A, dtype=store), Kp_t, Np_t))

        # Constant denominator for the weighted-average pseudoinverse:
        # A^H @ ones(n_out) == conj(column sums of A).  Computed once.
        self._cth_ones = jnp.conj(jnp.sum(self.A, axis=0)).reshape(input_shape)

    # ---- core apply -------------------------------------------------------
    def _apply(self, x, cfg, out_spatial):
        b, c = int(x.shape[0]), int(x.shape[1])
        M = b * c
        x_flat = jnp.reshape(x, (M, -1))

        if self._is_complex:
            xc = x_flat.astype(jnp.complex64)
            y_flat = _matmul_complex(jnp.real(xc), jnp.imag(xc),
                                     cfg["wr"], cfg["wi"],
                                     tk=cfg["tk"], tn=cfg["tn"], n_cols=cfg["n"])
        elif jnp.iscomplexobj(x_flat):
            # Real A, complex x: stack re/im along the tiny M axis so A is
            # streamed from HBM once instead of twice.
            xs = jnp.concatenate(
                [jnp.real(x_flat), jnp.imag(x_flat)], axis=0).astype(jnp.float32)
            y2 = _matmul_real(xs, cfg["w"], tk=cfg["tk"], tn=cfg["tn"],
                              n_cols=cfg["n"], w_buffers=self._w_buffers)
            y_flat = jax.lax.complex(y2[:M], y2[M:])
        else:
            y_flat = _matmul_real(x_flat, cfg["w"], tk=cfg["tk"], tn=cfg["tn"],
                                  n_cols=cfg["n"], w_buffers=self._w_buffers)
            y_flat = y_flat.astype(jnp.promote_types(x.dtype, self.A.dtype))

        return jnp.reshape(y_flat, (b, c) + tuple(out_spatial))

    # ---- LinearSystem interface --------------------------------------------
    def forward(self, x):
        # Y_flat = X_flat @ A^T
        return self._apply(x, self._fwd, self.output_shape)

    def transpose(self, y):
        # Z_flat = Y_flat @ A   (== A^T y row-wise)
        return self._apply(y, self._tr, self.input_shape)

    def conjugate(self, x):
        return jnp.conj(self.forward(jnp.conj(x)))

    def conjugate_transpose(self, y):
        return jnp.conj(self.transpose(jnp.conj(y)))

    def _pseudoinverse_weighted_average(self, y):
        numerator = self.conjugate_transpose(y)
        # Precomputed A^H @ ones; broadcasts over batch/channel dims.
        # NOTE: "+ 1e-10" mirrors the reference (signed offset, not |.|-eps).
        return numerator / (self._cth_ones + 1e-10)

    # TODO(synk): conjugate-gradient pseudoinverse is a host-level iterative
    # loop composed from forward/conjugate_transpose (the same Pallas kernel);
    # not a distinct Pallas hot path, so it is not re-implemented here.


if __name__ == "__main__":
    key = jax.random.PRNGKey(0)
    k_a, k_x, k_ar, k_ai, k_xc = jax.random.split(key, 5)

    # Shapes consistent with the module's [batch, channel, *spatial] convention.
    B, C = 2, 4
    input_shape = (16, 16)     # N_in  = 256
    output_shape = (8, 16)     # N_out = 128
    n_in = input_shape[0] * input_shape[1]
    n_out = output_shape[0] * output_shape[1]

    A = jax.random.normal(k_a, (n_out, n_in), dtype=jnp.float32) / jnp.sqrt(n_in)
    x = jax.random.normal(k_x, (B, C) + input_shape, dtype=jnp.float32)

    # --- real f32 operator --------------------------------------------------
    op = DenseLinearSystem(A, input_shape, output_shape)
    y = jax.block_until_ready(op.forward(x))
    z = jax.block_until_ready(op.conjugate_transpose(y))
    pinv = jax.block_until_ready(op._pseudoinverse_weighted_average(y))

    y_ref = (x.reshape(B * C, n_in) @ A.T).reshape((B, C) + output_shape)
    z_ref = (y_ref.reshape(B * C, n_out) @ A).reshape((B, C) + input_shape)
    d_ref = jnp.sum(A, axis=0).reshape(input_shape)
    p_ref = z_ref / (d_ref + 1e-10)

    assert y.shape == (B, C) + output_shape
    assert z.shape == (B, C) + input_shape
    assert jnp.allclose(y, y_ref, atol=1e-4, rtol=1e-4)
    assert jnp.allclose(z, z_ref, atol=1e-4, rtol=1e-4)
    assert jnp.allclose(pinv, p_ref, atol=1e-4, rtol=1e-4)

    # --- opt-in bf16 weight path (half the A HBM bytes, f32 accumulation) ---
    op_bf16 = DenseLinearSystem(A, input_shape, output_shape,
                                compute_dtype=jnp.bfloat16)
    y_bf16 = jax.block_until_ready(op_bf16.forward(x))
    assert y_bf16.dtype == jnp.float32
    assert jnp.allclose(y_bf16, y_ref, atol=1e-1, rtol=1e-1)

    # --- complex operator: single fused kernel (wr/wi streamed once) --------
    Ac = (jax.random.normal(k_ar, (n_out, n_in), dtype=jnp.float32)
          + 1j * jax.random.normal(k_ai, (n_out, n_in), dtype=jnp.float32)
          ) / jnp.sqrt(n_in)
    xc = (jax.random.normal(k_xc, (B, C) + input_shape, dtype=jnp.float32)
          + 0.5j * jax.random.normal(k_x, (B, C) + input_shape, dtype=jnp.float32))
    opc = DenseLinearSystem(Ac, input_shape, output_shape)
    yc = jax.block_until_ready(opc.forward(xc))
    zc = jax.block_until_ready(opc.conjugate_transpose(yc))

    yc_ref = (xc.reshape(B * C, n_in) @ Ac.T).reshape((B, C) + output_shape)
    zc_ref = jnp.conj(
        jnp.conj(yc_ref).reshape(B * C, n_out) @ Ac).reshape((B, C) + input_shape)
    assert jnp.allclose(yc, yc_ref, atol=1e-3, rtol=1e-3)
    assert jnp.allclose(zc, zc_ref, atol=1e-3, rtol=1e-3)

    print("KERNEL_OK")
</pallas_src>

<mosaic_0001>
module attributes {stable_mosaic.version = 11 : i64} {
  func.func @_mm_kernel_single_k(%arg0: i32, %arg1: i32, %arg2: i32, %arg3: memref<8x256xf32, #tpu.memory_space<vmem>>, %arg4: memref<256x128xf32, #tpu.memory_space<vmem>>, %arg5: memref<8x128xf32, #tpu.memory_space<vmem>>) attributes {dimension_semantics = [#tpu.dimension_semantics<parallel>, #tpu.dimension_semantics<parallel>, #tpu.dimension_semantics<arbitrary>], iteration_bounds = array<i64: 1, 1, 1>, scalar_prefetch = 0 : i64, scratch_operands = 0 : i64, tpu.core_type = #tpu.core_type<tc>, window_params = [{transform_indices = @transform_0, window_bounds = array<i64: 8, 256>}, {transform_indices = @transform_1, window_bounds = array<i64: 256, 128>}, {transform_indices = @transform_2, window_bounds = array<i64: 8, 128>}]} {
    %c0 = arith.constant 0 : index
    %c0_0 = arith.constant 0 : index
    %0 = vector.load %arg3[%c0, %c0_0] : memref<8x256xf32, #tpu.memory_space<vmem>>, vector<8x256xf32>
    %c0_1 = arith.constant 0 : index
    %c0_2 = arith.constant 0 : index
    %1 = vector.load %arg4[%c0_1, %c0_2] : memref<256x128xf32, #tpu.memory_space<vmem>>, vector<256x128xf32>
    %cst = arith.constant dense<0.000000e+00> : vector<8x128xf32>
    %2 = tpu.matmul %0, %1, %cst {dimension_numbers = #tpu.dot_dimension_numbers<[1], [0], [0], [1], [0, 0, 1, 1], [], []>} : vector<8x256xf32>, vector<256x128xf32>, vector<8x128xf32> -> vector<8x128xf32>
    %c0_3 = arith.constant 0 : index
    %c0_4 = arith.constant 0 : index
    %3 = vector.load %arg5[%c0_3, %c0_4] : memref<8x128xf32, #tpu.memory_space<vmem>>, vector<8x128xf32>
    tpu.vector_store %arg5[%c0_3, %c0_4], %2 {strides = array<i32>} : memref<8x128xf32, #tpu.memory_space<vmem>>, vector<8x128xf32>,
    return
  }
  func.func @transform_0(%arg0: i32, %arg1: i32, %arg2: i32) -> (i32, i32) {
    %c0_i32 = arith.constant 0 : i32
    return %arg0, %arg2 : i32, i32
  }
  func.func @transform_1(%arg0: i32, %arg1: i32, %arg2: i32) -> (i32, i32) {
    %c0_i32 = arith.constant 0 : i32
    return %arg2, %arg1 : i32, i32
  }
  func.func @transform_2(%arg0: i32, %arg1: i32, %arg2: i32) -> (i32, i32) {
    %c0_i32 = arith.constant 0 : i32
    return %arg0, %arg1 : i32, i32
  }
}

</mosaic_0001>

<llo_original>
// kernel: _matmul_real.1
$region0: #{_matmul_real.1}
  #allocation0 [shape = 'u32[]', space=smem, size = 0x4, offset = 0x4, fixed_abs, tag = 'smem constant byte address 0x4 - core index']
  #allocation1 [shape = 'u32[144,128]{1,0:T(1,128)}', space=vmem, size = 0x12000, scoped, tag = 'internal scratch']
  %s0 = inlined_call_operand.hbm [shape: f32[8,256], index: 0, kind: input, shape index: {}]
  %s1 = inlined_call_operand.hbm [shape: f32[256,128], index: 1, kind: input, shape index: {}]
  %s2 = inlined_call_operand.hbm [shape: f32[8,128], index: 2, kind: output, shape index: {}]
  %s3 = sld [smem:[#allocation0]]
  $region26: #{_matmul_real.1} parent=0
    _
  %s5 = ssub.s32 1, %s3
  %s6 = scalar_select 0, %s5, %s3
  $region1: #{_matmul_real.1} parent=0
    #allocation2 [shape = 'u8[8192]{0}', space=vmem, size = 0x2000, scoped, tag = 'input window, operand 0, single buffered']
    #allocation3 [shape = 's32[1]{0}', space=sflag, size = 0x4, scoped, tag = 'scoped memory for _matmul_real.1']
    #allocation4 [shape = 's32[1]{0}', space=sflag, size = 0x4, scoped, tag = 'scoped memory for _matmul_real.1']
    #allocation5 [shape = 'u8[131072]{0}', space=vmem, size = 0x20000, scoped, tag = 'input window, operand 1, single buffered']
    #allocation6 [shape = 's32[1]{0}', space=sflag, size = 0x4, scoped, tag = 'scoped memory for _matmul_real.1']
    #allocation7 [shape = 'u8[4096]{0}', space=vmem, size = 0x1000, scoped, tag = 'output window, operand 0, single buffered']
    %7 = vsyncpa [#allocation3], 0
    %8 = vsyncpa [#allocation6], 0
    %9 = vsyncpa [#allocation4], 0
    // Predicated region
    $region2: #{_matmul_real.1} parent=1 // pred_check
      _
    $region3: #{_matmul_real.1} parent=1 // pred_check_branch
      %11 = sbr.rel (0) target = $region5
    $region4: #{_matmul_real.1} parent=1 // pred_region
      %s13 = ssub.s32 256, 256
      %14 = vsyncadd [#allocation3], %s13
      %s16 = sshll.u32 [#allocation2], 4
      %s17 = int_to_ptr.vmem [resolvable:$true] %s16
      %19 = dma.hbm_to_vmem [thread:$0]  %s0, 256, %s17, [#allocation3]
    $region5: #{_matmul_real.1} parent=1 // pred_fallthru
      _
    // Predicated region
    $region6: #{_matmul_real.1} parent=1 // pred_check
      _
    $region7: #{_matmul_real.1} parent=1 // pred_check_branch
      %21 = sbr.rel (0) target = $region9
    $region8: #{_matmul_real.1} parent=1 // pred_region
      %s23 = ssub.s32 4096, 4096
      %24 = vsyncadd [#allocation6], %s23
      %s25 = sshll.u32 [#allocation5], 4
      %s26 = int_to_ptr.vmem [resolvable:$true] %s25
      %31 = dma.hbm_to_vmem [thread:$0]  %s1, 4096, %s26, [#allocation6], 128, 128, 8
    $region9: #{_matmul_real.1} parent=1 // pred_fallthru
      _
    // Predicated region
    $region10: #{_matmul_real.1} parent=1 // pred_check
      _
    $region11: #{_matmul_real.1} parent=1 // pred_check_branch
      %33 = sbr.rel (0) target = $region13
    $region12: #{_matmul_real.1} parent=1 // pred_region
      %34 = dma.done [#allocation3], 256
    $region13: #{_matmul_real.1} parent=1 // pred_fallthru
      _
    // Predicated region
    $region14: #{_matmul_real.1} parent=1 // pred_check
      _
    $region15: #{_matmul_real.1} parent=1 // pred_check_branch
      %36 = sbr.rel (0) target = $region17
    $region16: #{_matmul_real.1} parent=1 // pred_region
      %37 = dma.done [#allocation6], 4096
    $region17: #{_matmul_real.1} parent=1 // pred_fallthru
      _
    %v38 = vld [vmem:[#allocation2] sm:$0xff]
    %v39 = vld [vmem:[#allocation2 + $0x8] sm:$0xff]
    %v40 = vld [vmem:[#allocation5] sm:$0xff]
    %v41 = vld [vmem:[#allocation5 + $0x8] sm:$0xff]
    %v42 = vld [vmem:[#allocation5 + $0x10] sm:$0xff]
    %v43 = vld [vmem:[#allocation5 + $0x18] sm:$0xff]
    %v44 = vld [vmem:[#allocation5 + $0x20] sm:$0xff]
    %v45 = vld [vmem:[#allocation5 + $0x28] sm:$0xff]
    %v46 = vld [vmem:[#allocation5 + $0x30] sm:$0xff]
    %v47 = vld [vmem:[#allocation5 + $0x38] sm:$0xff]
    %v48 = vld [vmem:[#allocation5 + $0x40] sm:$0xff]
    %v49 = vld [vmem:[#allocation5 + $0x48] sm:$0xff]
    %v50 = vld [vmem:[#allocation5 + $0x50] sm:$0xff]
    %v51 = vld [vmem:[#allocation5 + $0x58] sm:$0xff]
    %v52 = vld [vmem:[#allocation5 + $0x60] sm:$0xff]
    %v53 = vld [vmem:[#allocation5 + $0x68] sm:$0xff]
    %v54 = vld [vmem:[#allocation5 + $0x70] sm:$0xff]
    %v55 = vld [vmem:[#allocation5 + $0x78] sm:$0xff]
    %v56 = vld [vmem:[#allocation5 + $0x80] sm:$0xff]
    %v57 = vld [vmem:[#allocation5 + $0x88] sm:$0xff]
    %v58 = vld [vmem:[#allocation5 + $0x90] sm:$0xff]
    %v59 = vld [vmem:[#allocation5 + $0x98] sm:$0xff]
    %v60 = vld [vmem:[#allocation5 + $0xa0] sm:$0xff]
    %v61 = vld [vmem:[#allocation5 + $0xa8] sm:$0xff]
    %v62 = vld [vmem:[#allocation5 + $0xb0] sm:$0xff]
    %v63 = vld [vmem:[#allocation5 + $0xb8] sm:$0xff]
    %v64 = vld [vmem:[#allocation5 + $0xc0] sm:$0xff]
    %v65 = vld [vmem:[#allocation5 + $0xc8] sm:$0xff]
    %v66 = vld [vmem:[#allocation5 + $0xd0] sm:$0xff]
    %v67 = vld [vmem:[#allocation5 + $0xd8] sm:$0xff]
    %v68 = vld [vmem:[#allocation5 + $0xe0] sm:$0xff]
    %v69 = vld [vmem:[#allocation5 + $0xe8] sm:$0xff]
    %v70 = vld [vmem:[#allocation5 + $0xf0] sm:$0xff]
    %v71 = vld [vmem:[#allocation5 + $0xf8] sm:$0xff]
    %72 = vmatprep.subr.mxu0 0.0
    %73 = vmatpush1.msra.mxu0 %v40
    %74 = vmatprep.subr.mxu0 0.0
    %75 = vmatpush1.msra.mxu0 %v41
    %76 = vmatprep.subr.mxu0 0.0
    %77 = vmatpush1.msra.mxu0 %v42
    %78 = vmatprep.subr.mxu0 0.0
    %79 = vmatpush1.msra.mxu0 %v43
    %80 = vmatprep.subr.mxu0 0.0
    %81 = vmatpush1.msra.mxu0 %v44
    %82 = vmatprep.subr.mxu0 0.0
    %83 = vmatpush1.msra.mxu0 %v45
    %84 = vmatprep.subr.mxu0 0.0
    %85 = vmatpush1.msra.mxu0 %v46
    %86 = vmatprep.subr.mxu0 0.0
    %87 = vmatpush1.msra.mxu0 %v47
    %88 = vmatprep.subr.mxu0 0.0
    %89 = vmatpush1.msra.mxu0 %v48
    %90 = vmatprep.subr.mxu0 0.0
    %91 = vmatpush1.msra.mxu0 %v49
    %92 = vmatprep.subr.mxu0 0.0
    %93 = vmatpush1.msra.mxu0 %v50
    %94 = vmatprep.subr.mxu0 0.0
    %95 = vmatpush1.msra.mxu0 %v51
    %96 = vmatprep.subr.mxu0 0.0
    %97 = vmatpush1.msra.mxu0 %v52
    %98 = vmatprep.subr.mxu0 0.0
    %99 = vmatpush1.msra.mxu0 %v53
    %100 = vmatprep.subr.mxu0 0.0
    %101 = vmatpush1.msra.mxu0 %v54
    %102 = vmatprep.subr.mxu0 0.0
    %103 = vmatpush1.msra.mxu0 %v55
    %104 = vmatprep.subr.mxu0 0.0
    %105 = vmatpush1.msra.mxu0 %v56
    %106 = vmatprep.subr.mxu0 0.0
    %107 = vmatpush1.msra.mxu0 %v57
    %108 = vmatprep.subr.mxu0 0.0
    %109 = vmatpush1.msra.mxu0 %v58
    %110 = vmatprep.subr.mxu0 0.0
    %111 = vmatpush1.msra.mxu0 %v59
    %112 = vmatprep.subr.mxu0 0.0
    %113 = vmatpush1.msra.mxu0 %v60
    %114 = vmatprep.subr.mxu0 0.0
    %115 = vmatpush1.msra.mxu0 %v61
    %116 = vmatprep.subr.mxu0 0.0
    %117 = vmatpush1.msra.mxu0 %v62
    %118 = vmatprep.subr.mxu0 0.0
    %119 = vmatpush1.msra.mxu0 %v63
    %120 = vmatprep.subr.mxu0 0.0
    %121 = vmatpush1.msra.mxu0 %v64
    %122 = vmatprep.subr.mxu0 0.0
    %123 = vmatpush1.msra.mxu0 %v65
    %124 = vmatprep.subr.mxu0 0.0
    %125 = vmatpush1.msra.mxu0 %v66
    %126 = vmatprep.subr.mxu0 0.0
    %127 = vmatpush1.msra.mxu0 %v67
    %128 = vmatprep.subr.mxu0 0.0
    %129 = vmatpush1.msra.mxu0 %v68
    %130 = vmatprep.subr.mxu0 0.0
    %131 = vmatpush1.msra.mxu0 %v69
    %132 = vmatprep.subr.mxu0 0.0
    %133 = vmatpush1.msra.mxu0 %v70
    %134 = vmatprep.subr.mxu0 0.0
    %135 = vmatpush1.msra.mxu0 %v71
    %136 = vmatprep.mubr.f32.mxu0 %v39
    %137 = vmatmul.mubr.f32.gmra.mrb[0].mxu0 %v38
    %v138 = vpop.f32.mrb[0].mxu0
    %v139 = vadd.f32 0.0, %v138
    %v140 = vpop.f32.mrb[0].mxu0
    %141 = vdwg.mxu0
    %142 = vst [vmem:[#allocation7] sm:$0xff] %v139
    // Predicated region
    $region18: #{_matmul_real.1} parent=1 // pred_check
      _
    $region19: #{_matmul_real.1} parent=1 // pred_check_branch
      %144 = sbr.rel (0) target = $region21
    $region20: #{_matmul_real.1} parent=1 // pred_region
      %s146 = ssub.s32 128, 128
      %147 = vsyncadd [#allocation4], %s146
      %s149 = sshll.u32 [#allocation7], 4
      %s150 = int_to_ptr.vmem [resolvable:$true] %s149
      %152 = dma.vmem_to_hbm [thread:$0]  %s150, 128, %s2, [#allocation4]
    $region21: #{_matmul_real.1} parent=1 // pred_fallthru
      _
    // Predicated region
    $region22: #{_matmul_real.1} parent=1 // pred_check
      _
    $region23: #{_matmul_real.1} parent=1 // pred_check_branch
      %154 = sbr.rel (0) target = $region25
    $region24: #{_matmul_real.1} parent=1 // pred_region
      %155 = dma.done [#allocation4], 128
    $region25: #{_matmul_real.1} parent=1 // pred_fallthru
      _
    %156 = vsyncpa [#allocation3], 1
    %157 = vsyncpa [#allocation6], 1
    %158 = vsyncpa [#allocation4], 1

</llo_original>
